<compile_context>
chip_gen: v6e
topology: v6e:2x2x1
jax: 0.10.0
libtpu: 0.0.40
codegen_flags: <defaults>
</compile_context>

<pallas_src>
import functools

import jax
import jax.numpy as jnp
from jax.experimental import pallas as pl
from jax.experimental.pallas import tpu as pltpu

_VMEM_LIMIT = 32 * 1024 * 1024   # explicit scoped-VMEM budget; safe on v5e/v6e/v7x


def _excite(pooled, w1, w2):
    """Bias-free 2-layer MLP + sigmoid.  pooled: (1, C) f32 -> (1, C) f32."""
    hidden = jnp.dot(pooled, w1, preferred_element_type=jnp.float32)   # (1, Cb)
    hidden = jnp.maximum(hidden, 0.0)
    logits = jnp.dot(hidden, w2, preferred_element_type=jnp.float32)   # (1, C)
    return jax.nn.sigmoid(logits)


# ---------------------------------------------------------------------------
# Fused single-pass kernel: pool + excitation + rescale, one batch row / step.
# ---------------------------------------------------------------------------
def _fused_kernel(x_ref, w1_ref, w2_ref, o_ref, *, inv_hw):
    """x_ref/o_ref: (1, C, HW_pad); w1_ref: (C, Cb); w2_ref: (Cb, C)."""
    x = x_ref[...].astype(jnp.float32)                    # (1, C, HW_pad)
    pooled = jnp.sum(x, axis=-1) * inv_hw                 # (1, C)  true mean
    scale = _excite(pooled, w1_ref[...], w2_ref[...])     # (1, C)
    o_ref[...] = (x * scale[:, :, None]).astype(o_ref.dtype)


# ---------------------------------------------------------------------------
# Streaming two-pass kernels (fallback for rows that don't fit VMEM).
# ---------------------------------------------------------------------------
def _pool_excite_kernel(x_ref, w1_ref, w2_ref, scale_ref, acc_ref, *, inv_hw):
    """Pass 1: streaming global-average-pool + excitation MLP.

    x_ref    : (1, C, hw_tile)  activations (f32 or bf16)
    w1_ref   : (C, Cb) f32      first Linear, pre-transposed (in, out)
    w2_ref   : (Cb, C) f32      second Linear, pre-transposed (in, out)
    scale_ref: (1, C, 1) f32    per-(batch, channel) sigmoid gate (output)
    acc_ref  : (1, C) f32       VMEM running sum over spatial tiles
    """
    t = pl.program_id(1)

    @pl.when(t == 0)
    def _init():
        acc_ref[...] = jnp.zeros_like(acc_ref)

    x = x_ref[...].astype(jnp.float32)                    # (1, C, hw_tile)
    acc_ref[...] += jnp.sum(x, axis=-1)                   # (1, C)

    @pl.when(t == pl.num_programs(1) - 1)
    def _finalize():
        pooled = acc_ref[...] * inv_hw                    # (1, C) true mean
        scale = _excite(pooled, w1_ref[...], w2_ref[...])
        scale_ref[...] = scale[:, :, None]                # (1, C, 1)


def _scale_kernel(x_ref, s_ref, o_ref):
    """Pass 2: out = x * scale, tiled over (B, spatial tiles)."""
    x = x_ref[...].astype(jnp.float32)     # (1, C, hw_tile)
    o_ref[...] = (x * s_ref[...]).astype(o_ref.dtype)


# ---------------------------------------------------------------------------
# Wrapper
# ---------------------------------------------------------------------------
def se_block(x_nchw, w1, w2, *, hw_tile=512, max_fused_bytes=None):
    """SE block forward.

    x_nchw : (B, C, H, W)  activations (f32 or bf16)
    w1     : (Cb, C)       torch-layout first Linear weight (bias-free)
    w2     : (C, Cb)       torch-layout second Linear weight (bias-free)
    """
    B, C, H, W = x_nchw.shape
    Cb = w1.shape[0]
    HW = H * W

    x3 = x_nchw.reshape(B, C, HW)
    hw_pad_full = pl.cdiv(HW, 128) * 128                  # lane-dense full row

    w1_t = jnp.transpose(w1).astype(jnp.float32)          # (C, Cb)
    w2_t = jnp.transpose(w2).astype(jnp.float32)          # (Cb, C)
    weight_bytes = 4 * (w1_t.size + w2_t.size)

    itemsize = jnp.dtype(x3.dtype).itemsize
    if max_fused_bytes is None:
        max_fused_bytes = (_VMEM_LIMIT * 3) // 5          # headroom under 32 MiB
    # double-buffered input + double-buffered output blocks + resident weights
    fused_block_bytes = 4 * C * hw_pad_full * itemsize + weight_bytes

    if fused_block_bytes <= max_fused_bytes:
        # ---- Fused single pass: x read once + written once ------------------
        if hw_pad_full != HW:
            x3 = jnp.pad(x3, ((0, 0), (0, 0), (0, hw_pad_full - HW)))
        out = pl.pallas_call(
            functools.partial(_fused_kernel, inv_hw=1.0 / float(HW)),
            out_shape=jax.ShapeDtypeStruct((B, C, hw_pad_full), x3.dtype),
            grid_spec=pltpu.PrefetchScalarGridSpec(
                num_scalar_prefetch=0,
                grid=(B,),
                in_specs=[
                    pl.BlockSpec((1, C, hw_pad_full), lambda b: (b, 0, 0)),
                    pl.BlockSpec((C, Cb), lambda b: (0, 0)),   # resident in VMEM
                    pl.BlockSpec((Cb, C), lambda b: (0, 0)),
                ],
                out_specs=pl.BlockSpec((1, C, hw_pad_full), lambda b: (b, 0, 0)),
            ),
            compiler_params=pltpu.CompilerParams(
                dimension_semantics=("parallel",),            # megacore on v7x
                vmem_limit_bytes=_VMEM_LIMIT,
            ),
        )(x3, w1_t, w2_t)
        return out[:, :, :HW].reshape(B, C, H, W)

    # ---- Streaming two-pass fallback ----------------------------------------
    hw_tile = max(128, min((int(hw_tile) // 128) * 128, hw_pad_full))
    hw_pad = pl.cdiv(HW, hw_tile) * hw_tile
    if hw_pad != HW:
        x3 = jnp.pad(x3, ((0, 0), (0, 0), (0, hw_pad - HW)))
    n_hw = hw_pad // hw_tile

    # Pass 1: pooled sums streamed over spatial tiles + excitation MLP.
    scale = pl.pallas_call(
        functools.partial(_pool_excite_kernel, inv_hw=1.0 / float(HW)),
        out_shape=jax.ShapeDtypeStruct((B, C, 1), jnp.float32),
        grid_spec=pltpu.PrefetchScalarGridSpec(
            num_scalar_prefetch=0,
            grid=(B, n_hw),                                   # reduction axis last
            in_specs=[
                pl.BlockSpec((1, C, hw_tile), lambda b, t: (b, 0, t)),
                pl.BlockSpec((C, Cb), lambda b, t: (0, 0)),   # resident in VMEM
                pl.BlockSpec((Cb, C), lambda b, t: (0, 0)),
            ],
            out_specs=pl.BlockSpec((1, C, 1), lambda b, t: (b, 0, 0)),
            scratch_shapes=[pltpu.VMEM((1, C), jnp.float32)],
        ),
        compiler_params=pltpu.CompilerParams(
            dimension_semantics=("parallel", "arbitrary"),
            vmem_limit_bytes=_VMEM_LIMIT,
        ),
    )(x3, w1_t, w2_t)

    # Pass 2: elementwise channel rescale (HBM-bandwidth bound).
    out = pl.pallas_call(
        _scale_kernel,
        out_shape=jax.ShapeDtypeStruct((B, C, hw_pad), x3.dtype),
        grid_spec=pltpu.PrefetchScalarGridSpec(
            num_scalar_prefetch=0,
            grid=(B, n_hw),
            in_specs=[
                pl.BlockSpec((1, C, hw_tile), lambda b, t: (b, 0, t)),
                pl.BlockSpec((1, C, 1), lambda b, t: (b, 0, 0)),
            ],
            out_specs=pl.BlockSpec((1, C, hw_tile), lambda b, t: (b, 0, t)),
        ),
        compiler_params=pltpu.CompilerParams(
            dimension_semantics=("parallel", "parallel"),     # megacore on v7x
            vmem_limit_bytes=_VMEM_LIMIT,
        ),
    )(x3, scale)

    return out[:, :, :HW].reshape(B, C, H, W)


def se_block_ref(x_nchw, w1, w2):
    """Pure-JAX f32 reference for validation."""
    xf = x_nchw.astype(jnp.float32)
    pooled = jnp.mean(xf, axis=(2, 3))                                   # (B, C)
    hidden = jnp.maximum(pooled @ w1.astype(jnp.float32).T, 0.0)         # (B, Cb)
    scale = jax.nn.sigmoid(hidden @ w2.astype(jnp.float32).T)            # (B, C)
    return xf * scale[:, :, None, None]


if __name__ == "__main__":
    key = jax.random.PRNGKey(0)
    kx, k1, k2, kx2 = jax.random.split(key, 4)

    # Case 1: fused single-pass path. B=2, C=32, 16x16 spatial, Cb=8.
    B, C, H, W, Cb = 2, 32, 16, 16, 8
    x = jax.random.normal(kx, (B, C, H, W), dtype=jnp.float32)
    w1 = jax.random.normal(k1, (Cb, C), dtype=jnp.float32) * 0.1
    w2 = jax.random.normal(k2, (C, Cb), dtype=jnp.float32) * 0.1

    out = jax.block_until_ready(se_block(x, w1, w2))
    ref = se_block_ref(x, w1, w2)
    assert out.shape == (B, C, H, W)
    assert jnp.allclose(out, ref, atol=1e-5, rtol=1e-5), "fused f32 mismatch"

    # Case 2: streaming two-pass path (forced), hw_tile=128 -> 2 spatial tiles
    # per batch row: exercises the accumulator + pl.when finalize.
    out_s = jax.block_until_ready(
        se_block(x, w1, w2, hw_tile=128, max_fused_bytes=0))
    assert jnp.allclose(out_s, ref, atol=1e-5, rtol=1e-5), "streaming f32 mismatch"

    # Case 3: non-multiple-of-128 spatial (10x12 -> HW=120, padded to 128) with
    # bf16 activations (pooling / excitation stay f32 inside the kernel).
    B2, C2, H2, W2, Cb2 = 2, 16, 10, 12, 4
    xb = jax.random.normal(kx2, (B2, C2, H2, W2), dtype=jnp.float32)
    w1b = jax.random.normal(k1, (Cb2, C2), dtype=jnp.float32) * 0.1
    w2b = jax.random.normal(k2, (C2, Cb2), dtype=jnp.float32) * 0.1

    out_b = jax.block_until_ready(se_block(xb.astype(jnp.bfloat16), w1b, w2b))
    ref_b = se_block_ref(xb.astype(jnp.bfloat16), w1b, w2b)
    assert out_b.dtype == jnp.bfloat16
    assert jnp.allclose(out_b.astype(jnp.float32), ref_b, atol=5e-2, rtol=5e-2), \
        "bf16 padded-spatial mismatch"

    print("KERNEL_OK")
</pallas_src>

<mosaic_0001>
module attributes {stable_mosaic.version = 11 : i64} {
  func.func @_fused_kernel(%arg0: i32, %arg1: memref<1x32x256xf32, #tpu.memory_space<vmem>>, %arg2: memref<32x8xf32, #tpu.memory_space<vmem>>, %arg3: memref<8x32xf32, #tpu.memory_space<vmem>>, %arg4: memref<1x32x256xf32, #tpu.memory_space<vmem>>) attributes {dimension_semantics = [#tpu.dimension_semantics<parallel>], iteration_bounds = array<i64: 2>, scalar_prefetch = 0 : i64, scratch_operands = 0 : i64, tpu.core_type = #tpu.core_type<tc>, window_params = [{transform_indices = @transform_0, window_bounds = array<i64: 1, 32, 256>}, {pipeline_mode = #tpu.pipeline_mode<synchronous>, transform_indices = @transform_1, window_bounds = array<i64: 32, 8>}, {pipeline_mode = #tpu.pipeline_mode<synchronous>, transform_indices = @transform_2, window_bounds = array<i64: 8, 32>}, {transform_indices = @transform_3, window_bounds = array<i64: 1, 32, 256>}]} {
    %c0 = arith.constant 0 : index
    %c0_0 = arith.constant 0 : index
    %c0_1 = arith.constant 0 : index
    %0 = vector.load %arg1[%c0, %c0_0, %c0_1] : memref<1x32x256xf32, #tpu.memory_space<vmem>>, vector<1x32x256xf32>
    %cst = arith.constant dense<0.000000e+00> : vector<1x32xf32>
    %1 = vector.multi_reduction <add>, %0, %cst [2] : vector<1x32x256xf32> to vector<1x32xf32>
    %cst_2 = arith.constant 3.906250e-03 : f32
    %2 = vector.broadcast %cst_2 : f32 to vector<1x32xf32>
    %3 = arith.mulf %1, %2 : vector<1x32xf32>
    %c0_3 = arith.constant 0 : index
    %c0_4 = arith.constant 0 : index
    %4 = vector.load %arg2[%c0_3, %c0_4] : memref<32x8xf32, #tpu.memory_space<vmem>>, vector<32x8xf32>
    %c0_5 = arith.constant 0 : index
    %c0_6 = arith.constant 0 : index
    %5 = vector.load %arg3[%c0_5, %c0_6] : memref<8x32xf32, #tpu.memory_space<vmem>>, vector<8x32xf32>
    %cst_7 = arith.constant dense<0.000000e+00> : vector<1x8xf32>
    %6 = tpu.matmul %3, %4, %cst_7 {dimension_numbers = #tpu.dot_dimension_numbers<[1], [0], [0], [1], [0, 0, 1, 1], [], []>} : vector<1x32xf32>, vector<32x8xf32>, vector<1x8xf32> -> vector<1x8xf32>
    %cst_8 = arith.constant 0.000000e+00 : f32
    %7 = vector.broadcast %cst_8 : f32 to vector<1x8xf32>
    %8 = arith.maximumf %6, %7 : vector<1x8xf32>
    %cst_9 = arith.constant dense<0.000000e+00> : vector<1x32xf32>
    %9 = tpu.matmul %8, %5, %cst_9 {dimension_numbers = #tpu.dot_dimension_numbers<[1], [0], [0], [1], [0, 0, 1, 1], [], []>} : vector<1x8xf32>, vector<8x32xf32>, vector<1x32xf32> -> vector<1x32xf32>
    %10 = arith.negf %9 : vector<1x32xf32>
    %11 = math.exp %10 : vector<1x32xf32>
    %cst_10 = arith.constant 1.000000e+00 : f32
    %12 = vector.broadcast %cst_10 : f32 to vector<1x32xf32>
    %13 = arith.addf %12, %11 : vector<1x32xf32>
    %14 = arith.divf %12, %13 : vector<1x32xf32>
    %15 = vector.shape_cast %14 : vector<1x32xf32> to vector<1x32x1xf32>
    %16 = vector.broadcast %15 : vector<1x32x1xf32> to vector<1x32x256xf32>
    %17 = arith.mulf %0, %16 : vector<1x32x256xf32>
    %c0_11 = arith.constant 0 : index
    %c0_12 = arith.constant 0 : index
    %c0_13 = arith.constant 0 : index
    %18 = vector.load %arg4[%c0_11, %c0_12, %c0_13] : memref<1x32x256xf32, #tpu.memory_space<vmem>>, vector<1x32x256xf32>
    tpu.vector_store %arg4[%c0_11, %c0_12, %c0_13], %17 {strides = array<i32>} : memref<1x32x256xf32, #tpu.memory_space<vmem>>, vector<1x32x256xf32>,
    return
  }
  func.func @transform_0(%arg0: i32) -> (i32, i32, i32) {
    %c0_i32 = arith.constant 0 : i32
    %c0_i32_0 = arith.constant 0 : i32
    %c0_i32_1 = arith.constant 0 : i32
    return %arg0, %c0_i32, %c0_i32_0 : i32, i32, i32
  }
  func.func @transform_1(%arg0: i32) -> (i32, i32) {
    %c0_i32 = arith.constant 0 : i32
    %c0_i32_0 = arith.constant 0 : i32
    %c0_i32_1 = arith.constant 0 : i32
    return %c0_i32, %c0_i32_0 : i32, i32
  }
  func.func @transform_2(%arg0: i32) -> (i32, i32) {
    %c0_i32 = arith.constant 0 : i32
    %c0_i32_0 = arith.constant 0 : i32
    %c0_i32_1 = arith.constant 0 : i32
    return %c0_i32, %c0_i32_0 : i32, i32
  }
  func.func @transform_3(%arg0: i32) -> (i32, i32, i32) {
    %c0_i32 = arith.constant 0 : i32
    %c0_i32_0 = arith.constant 0 : i32
    %c0_i32_1 = arith.constant 0 : i32
    return %arg0, %c0_i32, %c0_i32_0 : i32, i32, i32
  }
}

</mosaic_0001>

<llo_original>
// kernel: tpu_custom_call.1
$region0: #{tpu_custom_call.1}
  #allocation0 [shape = 'u32[]', space=smem, size = 0x4, offset = 0x4, fixed_abs, tag = 'smem constant byte address 0x4 - core index']
  #allocation1 [shape = 'u32[144,128]{1,0:T(1,128)}', space=vmem, size = 0x12000, scoped, tag = 'internal scratch']
  %s0 = inlined_call_operand.hbm [shape: f32[2,32,256], index: 0, kind: input, shape index: {}]
  %s1 = inlined_call_operand.vmem [shape: f32[32,8], index: 1, kind: input, shape index: {}]
  %s2 = inlined_call_operand.vmem [shape: f32[8,32], index: 2, kind: input, shape index: {}]
  %s3 = inlined_call_operand.hbm [shape: f32[2,32,256], index: 3, kind: output, shape index: {}]
  %s4 = sld [smem:[#allocation0]]
  $region49: #{tpu_custom_call.1} parent=0
    _
  %s6 = ssub.s32 1, %s4
  %s7 = scalar_select 0, %s6, %s4
  $region1: #{tpu_custom_call.1} parent=0
    #allocation2 [shape = 'u8[65536]{0}', space=vmem, size = 0x10000, scoped, tag = 'input window, operand 0']
    #allocation3 [shape = 's32[2]{0}', space=sflag, size = 0x8, scoped, tag = 'scoped memory for tpu_custom_call.1']
    #allocation4 [shape = 's32[2]{0}', space=sflag, size = 0x8, scoped, tag = 'scoped memory for tpu_custom_call.1']
    #allocation5 [shape = 'u8[65536]{0}', space=vmem, size = 0x10000, scoped, tag = 'output window, operand 0']
    %8 = vsyncpa [#allocation3], 0
    %s9 = scalar_lea.sflag [#allocation3], 1
    %10 = vsyncpa %s9, 0
    %11 = vsyncpa [#allocation4], 0
    %s12 = scalar_lea.sflag [#allocation4], 1
    %13 = vsyncpa %s12, 0
    loop: start=0, step=1, limit=4
    $region2: #{tpu_custom_call.1} parent=1 // loop_pre_header
      _
    $region3: #{tpu_custom_call.1} parent=1 // loop_header
      %s15 = sphi 0, %s19
      %p16 = scmp.ge.s32.totalorder %s15, 4
      %s25 = sphi 0, %s27
      %s28 = sphi 0, %s25
      %s29 = sphi 0, %s28
      %s45 = sphi 0, %s29
      %s49 = sphi 0, %s49
      %s51 = sphi 0, %s49
      %s52 = sphi 0, %s51
      %s66 = sphi 0, %s52
      %s70 = sphi 0, %s70
      %s72 = sphi 0, %s70
      %s73 = sphi 0, %s72
      %s87 = sphi 0, %s73
      %s93 = sphi 0, %s95
      %s96 = sphi 0, %s93
      %s97 = sphi 0, %s96
      %s113 = sphi 0, %s97
    $region4: #{tpu_custom_call.1} parent=1 // loop_header_branch
      %18 = sbr.rel (%p16) target = $region8
    $region5: #{tpu_custom_call.1} parent=1 // loop_body
      %s20 = ssub.s32 %s15, 1
      %s21 = ssub.s32 %s15, 2
      %s22 = sadd.s32 %s15, 1
      %s23 = ssub.s32 %s15, %s22
      %p24 = scmp.eq.s32.totalorder %s23, 0
      %s26 = sadd.s32 %s25, 1
      %s27 = scalar_select %p24, %s25, %s26
      %p30 = pneg %p24
      %p31 = scmp.eq.s32.totalorder %s15, 1
      %p32 = por %p30, %p31
      %p33 = scmp.ne.s32.totalorder %s25, %s28
      %p34 = scmp.eq.s32.totalorder %s15, 0
      %p35 = por %p33, %p34
      %p36 = scmp.ne.s32.totalorder %s25, %s28
      %p37 = scmp.eq.s32.totalorder %s20, 1
      %p38 = por %p36, %p37
      %p39 = scmp.ne.s32.totalorder %s28, %s29
      %p40 = scmp.eq.s32.totalorder %s20, 0
      %p41 = por %p39, %p40
      %p42 = scmp.ne.s32.totalorder %s28, %s29
      %p43 = scmp.eq.s32.totalorder %s21, 1
      %p44 = por %p42, %p43
      %p46 = scmp.ne.s32.totalorder %s29, %s45
      %p47 = scmp.eq.s32.totalorder %s21, 0
      %p48 = por %p46, %p47
      %s50 = sadd.s32 %s49, 1
      %p53 = scmp.eq.s32.totalorder %s15, 1
      %p54 = scmp.ne.s32.totalorder %s49, %s51
      %p55 = scmp.eq.s32.totalorder %s15, 0
      %p56 = por %p54, %p55
      %p57 = scmp.ne.s32.totalorder %s49, %s51
      %p58 = scmp.eq.s32.totalorder %s20, 1
      %p59 = por %p57, %p58
      %p60 = scmp.ne.s32.totalorder %s51, %s52
      %p61 = scmp.eq.s32.totalorder %s20, 0
      %p62 = por %p60, %p61
      %p63 = scmp.ne.s32.totalorder %s51, %s52
      %p64 = scmp.eq.s32.totalorder %s21, 1
      %p65 = por %p63, %p64
      %p67 = scmp.ne.s32.totalorder %s52, %s66
      %p68 = scmp.eq.s32.totalorder %s21, 0
      %p69 = por %p67, %p68
      %s71 = sadd.s32 %s70, 1
      %p74 = scmp.eq.s32.totalorder %s15, 1
      %p75 = scmp.ne.s32.totalorder %s70, %s72
      %p76 = scmp.eq.s32.totalorder %s15, 0
      %p77 = por %p75, %p76
      %p78 = scmp.ne.s32.totalorder %s70, %s72
      %p79 = scmp.eq.s32.totalorder %s20, 1
      %p80 = por %p78, %p79
      %p81 = scmp.ne.s32.totalorder %s72, %s73
      %p82 = scmp.eq.s32.totalorder %s20, 0
      %p83 = por %p81, %p82
      %p84 = scmp.ne.s32.totalorder %s72, %s73
      %p85 = scmp.eq.s32.totalorder %s21, 1
      %p86 = por %p84, %p85
      %p88 = scmp.ne.s32.totalorder %s73, %s87
      %p89 = scmp.eq.s32.totalorder %s21, 0
      %p90 = por %p88, %p89
      %s91 = ssub.s32 %s15, %s22
      %p92 = scmp.eq.s32.totalorder %s91, 0
      %s94 = sadd.s32 %s93, 1
      %s95 = scalar_select %p92, %s93, %s94
      %p98 = pneg %p92
      %p99 = scmp.eq.s32.totalorder %s15, 1
      %p100 = por %p98, %p99
      %p101 = scmp.ne.s32.totalorder %s93, %s96
      %p102 = scmp.eq.s32.totalorder %s15, 0
      %p103 = por %p101, %p102
      %p104 = scmp.ne.s32.totalorder %s93, %s96
      %p105 = scmp.eq.s32.totalorder %s20, 1
      %p106 = por %p104, %p105
      %p107 = scmp.ne.s32.totalorder %s96, %s97
      %p108 = scmp.eq.s32.totalorder %s20, 0
      %p109 = por %p107, %p108
      %p110 = scmp.ne.s32.totalorder %s96, %s97
      %p111 = scmp.eq.s32.totalorder %s21, 1
      %p112 = por %p110, %p111
      %p114 = scmp.ne.s32.totalorder %s97, %s113
      %p115 = scmp.eq.s32.totalorder %s21, 0
      %p116 = por %p114, %p115
      %p117 = scmp.le.s32.totalorder 1, %s15
      %p118 = scmp.lt.s32.totalorder %s15, 3
      %p119 = pnand %p117, %p118
      %p120 = pneg %p119
      // Predicated region
      $region9: #{tpu_custom_call.1} parent=5 // pred_check
        _
      $region10: #{tpu_custom_call.1} parent=5 // pred_check_branch
        %122 = sbr.rel (%p119) target = $region12
      $region11: #{tpu_custom_call.1} parent=5 // pred_region
        %s123 = ssub.s32 %s15, 1
        // Predicated region
        $region13: #{tpu_custom_call.1} parent=11 // pred_check
          %p124 = pneg %p62
        $region14: #{tpu_custom_call.1} parent=11 // pred_check_branch
          %126 = sbr.rel (%p124) target = $region16
        $region15: #{tpu_custom_call.1} parent=11 // pred_region
          _
        $region16: #{tpu_custom_call.1} parent=11 // pred_fallthru
          _
        // Predicated region
        $region17: #{tpu_custom_call.1} parent=11 // pred_check
          %p127 = pneg %p83
        $region18: #{tpu_custom_call.1} parent=11 // pred_check_branch
          %129 = sbr.rel (%p127) target = $region20
        $region19: #{tpu_custom_call.1} parent=11 // pred_region
          _
        $region20: #{tpu_custom_call.1} parent=11 // pred_fallthru
          _
      $region12: #{tpu_custom_call.1} parent=5 // pred_fallthru
        _
      %p130 = scmp.lt.s32.totalorder %s15, 2
      // Predicated region
      $region21: #{tpu_custom_call.1} parent=5 // pred_check
        %p131 = pneg %p130
      $region22: #{tpu_custom_call.1} parent=5 // pred_check_branch
        %133 = sbr.rel (%p131) target = $region24
      $region23: #{tpu_custom_call.1} parent=5 // pred_region
        // Predicated region
        $region25: #{tpu_custom_call.1} parent=23 // pred_check
          %p134 = pneg %p35
        $region26: #{tpu_custom_call.1} parent=23 // pred_check_branch
          %136 = sbr.rel (%p134) target = $region28
        $region27: #{tpu_custom_call.1} parent=23 // pred_region
          %s137 = sand.u32 %s25, 1
          %s138 = scalar_lea.sflag [#allocation3], %s137
          %s139 = sand.u32 %s25, 1
          %s140 = smul.addr %s139, 64
          %s141 = scalar_lea.vmem [#allocation2], %s140
          %s143 = ssub.s32 1024, 1024
          %144 = vsyncadd %s138, %s143
          %s145 = smul.addr %s15, 8
          %s146 = smul.addr %s145, 128
          %s147 = scalar_lea.hbm %s0, %s146
          %s148 = sshll.u32 %s141, 4
          %s149 = int_to_ptr.vmem [resolvable:$true] %s148
          %154 = dma.hbm_to_vmem [thread:$0]  %s147, 1024, %s149, %s138, 256, 256, 16
        $region28: #{tpu_custom_call.1} parent=23 // pred_fallthru
          _
      $region24: #{tpu_custom_call.1} parent=5 // pred_fallthru
        _
      %p155 = scmp.le.s32.totalorder 1, %s15
      %p156 = scmp.lt.s32.totalorder %s15, 3
      %p157 = pnand %p155, %p156
      %p158 = pneg %p157
      // Predicated region
      $region29: #{tpu_custom_call.1} parent=5 // pred_check
        _
      $region30: #{tpu_custom_call.1} parent=5 // pred_check_branch
        %160 = sbr.rel (%p157) target = $region32
      $region31: #{tpu_custom_call.1} parent=5 // pred_region
        %s161 = ssub.s32 %s15, 1
        %s162 = sand.u32 %s28, 1
        %s163 = scalar_lea.sflag [#allocation3], %s162
        %s164 = sand.u32 %s28, 1
        %s165 = smul.addr %s164, 64
        %s166 = scalar_lea.vmem [#allocation2], %s165
        // Predicated region
        $region33: #{tpu_custom_call.1} parent=31 // pred_check
          %p167 = pneg %p41
        $region34: #{tpu_custom_call.1} parent=31 // pred_check_branch
          %169 = sbr.rel (%p167) target = $region36
        $region35: #{tpu_custom_call.1} parent=31 // pred_region
          %170 = dma.done %s163, 1024
        $region36: #{tpu_custom_call.1} parent=31 // pred_fallthru
          _
        %s171 = sand.u32 %s28, 1
        %s172 = scalar_lea.sflag [#allocation3], %s171
        %s173 = sand.u32 %s28, 1
        %s174 = smul.addr %s173, 64
        %s175 = scalar_lea.vmem [#allocation2], %s174
        %p176 = pneg %p41
        %p177 = pneg %p38
        %p178 = pneg %p62
        %p179 = pneg %p59
        %p180 = pneg %p83
        %p181 = pneg %p80
        %p182 = pneg %p109
        %p183 = pneg %p106
        %s184 = sand.u32 %s96, 1
        %s185 = scalar_lea.sflag [#allocation4], %s184
        %s186 = sand.u32 %s96, 1
        %s187 = smul.addr %s186, 64
        %s188 = scalar_lea.vmem [#allocation5], %s187
        %v189 = vld [vmem:[%s166] sm:$0xff]
        %v190 = vld [vmem:[%s166 + $0x8] sm:$0xff]
        %v191 = vld [vmem:[%s166 + $0x10] sm:$0xff]
        %v192 = vld [vmem:[%s166 + $0x18] sm:$0xff]
        %v193 = vld [vmem:[%s166 + $0x20] sm:$0xff]
        %v194 = vld [vmem:[%s166 + $0x28] sm:$0xff]
        %v195 = vld [vmem:[%s166 + $0x30] sm:$0xff]
        %v196 = vld [vmem:[%s166 + $0x38] sm:$0xff]
        %v197 = vadd.f32 %v189, %v190
        %198 = vadd.xlane.f32.xlu0 %v197
        %v199 = vpop.xlane.xlu0 %198
        %v200 = vadd.f32 %v191, %v192
        %201 = vadd.xlane.f32.xlu0 %v200
        %v202 = vpop.xlane.xlu0 %201
        %v203 = vadd.f32 %v193, %v194
        %204 = vadd.xlane.f32.xlu0 %v203
        %v205 = vpop.xlane.xlu0 %204
        %v206 = vadd.f32 %v195, %v196
        %207 = vadd.xlane.f32.xlu0 %v206
        %v208 = vpop.xlane.xlu0 %207
        %v209 = vmul.f32 %v199, 0.00390625
        %v210 = vmul.f32 %v202, 0.00390625
        %v211 = vmul.f32 %v205, 0.00390625
        %v212 = vmul.f32 %v208, 0.00390625
        %v213 = vld [vmem:[%s1] sm:$0xff]
        %v214 = vld [vmem:[%s1 + $0x8] sm:$0xff]
        %v215 = vld [vmem:[%s1 + $0x10] sm:$0xff]
        %v216 = vld [vmem:[%s1 + $0x18] sm:$0xff]
        %v217 = vld [vmem:[%s2] sm:$0xff]
        %v222 = vlaneseq
        %v223 = vand.u32 %v222, 127
        %v224 = vlaneseq
        %v225 = vshrl.u32 %v224, 7
        %v226 = vsub.s32 %v223, %v225
        %v227 = vrot.slane %v209, %v226
        %v228 = vadd.s32 %v223, 4294967288
        %v229 = vlaneseq
        %v230 = vshrl.u32 %v229, 7
        %v231 = vsub.s32 %v228, %v230
        %v232 = vrot.slane %v210, %v231
        %vm233 = vcmask 130112
        %v234 = vsel %vm233, %v232, %v227
        %v235 = vadd.s32 %v223, 4294967280
        %v236 = vlaneseq
        %v237 = vshrl.u32 %v236, 7
        %v238 = vsub.s32 %v235, %v237
        %v239 = vrot.slane %v211, %v238
        %vm240 = vcmask 195712
        %v241 = vsel %vm240, %v239, %v234
        %v242 = vadd.s32 %v223, 4294967272
        %v243 = vlaneseq
        %v244 = vshrl.u32 %v243, 7
        %v245 = vsub.s32 %v242, %v244
        %v246 = vrot.slane %v212, %v245
        %vm247 = vcmask 261312
        %v248 = vsel %vm247, %v246, %v241
        %vm249 = vcmask 261120
        %v250 = vsel %vm249, %v248, 0
        %252 = vmatprep.subr.mxu0 0.0
        %253 = vmatpush1.msra.mxu0 0.0
        %254 = vmatprep.subr.mxu0 0.0
        %255 = vmatpush1.msra.mxu0 0.0
        %256 = vmatprep.subr.mxu0 0.0
        %257 = vmatpush1.msra.mxu0 0.0
        %258 = vmatprep.subr.mxu0 0.0
        %259 = vmatpush1.msra.mxu0 0.0
        %260 = vmatprep.subr.mxu0 0.0
        %261 = vmatpush1.msra.mxu0 0.0
        %262 = vmatprep.subr.mxu0 0.0
        %263 = vmatpush1.msra.mxu0 0.0
        %264 = vmatprep.subr.mxu0 0.0
        %265 = vmatpush1.msra.mxu0 0.0
        %266 = vmatprep.subr.mxu0 0.0
        %267 = vmatpush1.msra.mxu0 0.0
        %268 = vmatprep.subr.mxu0 0.0
        %269 = vmatpush1.msra.mxu0 0.0
        %270 = vmatprep.subr.mxu0 0.0
        %271 = vmatpush1.msra.mxu0 0.0
        %272 = vmatprep.subr.mxu0 0.0
        %273 = vmatpush1.msra.mxu0 0.0
        %274 = vmatprep.subr.mxu0 0.0
        %275 = vmatpush1.msra.mxu0 0.0
        %276 = vmatprep.subr.mxu0 0.0
        %277 = vmatpush1.msra.mxu0 %v216
        %278 = vmatprep.subr.mxu0 0.0
        %279 = vmatpush1.msra.mxu0 %v215
        %280 = vmatprep.subr.mxu0 0.0
        %281 = vmatpush1.msra.mxu0 %v214
        %282 = vmatprep.subr.mxu0 0.0
        %283 = vmatpush1.msra.mxu0 %v213
        %284 = vmatprep.subr.mxu0 0.0
        %285 = vmatpush2.msra.mxu0 0.0
        %286 = vmatprep.subr.mxu0 0.0
        %287 = vmatpush2.msra.mxu0 0.0
        %288 = vmatprep.subr.mxu0 0.0
        %289 = vmatpush2.msra.mxu0 0.0
        %290 = vmatprep.subr.mxu0 0.0
        %291 = vmatpush2.msra.mxu0 0.0
        %292 = vmatprep.subr.mxu0 0.0
        %293 = vmatpush2.msra.mxu0 0.0
        %294 = vmatprep.subr.mxu0 0.0
        %295 = vmatpush2.msra.mxu0 0.0
        %296 = vmatprep.subr.mxu0 0.0
        %297 = vmatpush2.msra.mxu0 0.0
        %298 = vmatprep.subr.mxu0 0.0
        %299 = vmatpush2.msra.mxu0 0.0
        %300 = vmatprep.subr.mxu0 0.0
        %301 = vmatpush2.msra.mxu0 0.0
        %302 = vmatprep.subr.mxu0 0.0
        %303 = vmatpush2.msra.mxu0 0.0
        %304 = vmatprep.subr.mxu0 0.0
        %305 = vmatpush2.msra.mxu0 0.0
        %306 = vmatprep.subr.mxu0 0.0
        %307 = vmatpush2.msra.mxu0 0.0
        %308 = vmatprep.subr.mxu0 0.0
        %309 = vmatpush2.msra.mxu0 0.0
        %310 = vmatprep.subr.mxu0 0.0
        %311 = vmatpush2.msra.mxu0 0.0
        %312 = vmatprep.subr.mxu0 0.0
        %313 = vmatpush2.msra.mxu0 0.0
        %314 = vmatprep.subr.mxu0 0.0
        %315 = vmatpush2.msra.mxu0 0.0
        %316 = vmatprep.mubr.f32.mxu0 0.0
        %317 = vmatmul.mubr.f32.gmra.mxu0 %v250
        %v318 = vpop.f32.mrf.mxu0
        %v319 = vadd.f32 0.0, %v318
        %v320 = vpop.f32.mrf.mxu0
        %321 = vdwg.mxu0
        %v322 = vmax.f32 %v319, 0.0
        %vm323 = vcmask 64512
        %v325 = vsel %vm323, %v322, 0
        %327 = vmatprep.subr.mxu0 0.0
        %328 = vmatpush1.msra.mxu0 0.0
        %329 = vmatprep.subr.mxu0 0.0
        %330 = vmatpush1.msra.mxu0 0.0
        %331 = vmatprep.subr.mxu0 0.0
        %332 = vmatpush1.msra.mxu0 0.0
        %333 = vmatprep.subr.mxu0 0.0
        %334 = vmatpush1.msra.mxu0 0.0
        %335 = vmatprep.subr.mxu0 0.0
        %336 = vmatpush1.msra.mxu0 0.0
        %337 = vmatprep.subr.mxu0 0.0
        %338 = vmatpush1.msra.mxu0 0.0
        %339 = vmatprep.subr.mxu0 0.0
        %340 = vmatpush1.msra.mxu0 0.0
        %341 = vmatprep.subr.mxu0 0.0
        %342 = vmatpush1.msra.mxu0 0.0
        %343 = vmatprep.subr.mxu0 0.0
        %344 = vmatpush1.msra.mxu0 0.0
        %345 = vmatprep.subr.mxu0 0.0
        %346 = vmatpush1.msra.mxu0 0.0
        %347 = vmatprep.subr.mxu0 0.0
        %348 = vmatpush1.msra.mxu0 0.0
        %349 = vmatprep.subr.mxu0 0.0
        %350 = vmatpush1.msra.mxu0 0.0
        %351 = vmatprep.subr.mxu0 0.0
        %352 = vmatpush1.msra.mxu0 0.0
        %353 = vmatprep.subr.mxu0 0.0
        %354 = vmatpush1.msra.mxu0 0.0
        %355 = vmatprep.subr.mxu0 0.0
        %356 = vmatpush1.msra.mxu0 0.0
        %357 = vmatprep.subr.mxu0 0.0
        %358 = vmatpush1.msra.mxu0 %v217
        %359 = vmatprep.subr.mxu0 0.0
        %360 = vmatpush2.msra.mxu0 0.0
        %361 = vmatprep.subr.mxu0 0.0
        %362 = vmatpush2.msra.mxu0 0.0
        %363 = vmatprep.subr.mxu0 0.0
        %364 = vmatpush2.msra.mxu0 0.0
        %365 = vmatprep.subr.mxu0 0.0
        %366 = vmatpush2.msra.mxu0 0.0
        %367 = vmatprep.subr.mxu0 0.0
        %368 = vmatpush2.msra.mxu0 0.0
        %369 = vmatprep.subr.mxu0 0.0
        %370 = vmatpush2.msra.mxu0 0.0
        %371 = vmatprep.subr.mxu0 0.0
        %372 = vmatpush2.msra.mxu0 0.0
        %373 = vmatprep.subr.mxu0 0.0
        %374 = vmatpush2.msra.mxu0 0.0
        %375 = vmatprep.subr.mxu0 0.0
        %376 = vmatpush2.msra.mxu0 0.0
        %377 = vmatprep.subr.mxu0 0.0
        %378 = vmatpush2.msra.mxu0 0.0
        %379 = vmatprep.subr.mxu0 0.0
        %380 = vmatpush2.msra.mxu0 0.0
        %381 = vmatprep.subr.mxu0 0.0
        %382 = vmatpush2.msra.mxu0 0.0
        %383 = vmatprep.subr.mxu0 0.0
        %384 = vmatpush2.msra.mxu0 0.0
        %385 = vmatprep.subr.mxu0 0.0
        %386 = vmatpush2.msra.mxu0 0.0
        %387 = vmatprep.subr.mxu0 0.0
        %388 = vmatpush2.msra.mxu0 0.0
        %389 = vmatprep.subr.mxu0 0.0
        %390 = vmatpush2.msra.mxu0 0.0
        %391 = vmatprep.mubr.f32.mxu0 0.0
        %392 = vmatmul.mubr.f32.gmra.mxu0 %v325
        %v393 = vpop.f32.mrf.mxu0
        %v394 = vadd.f32 0.0, %v393
        %v395 = vpop.f32.mrf.mxu0
        %396 = vdwg.mxu0
        %v397 = vxor.u32 %v394, 2147483648
        %v398 = vmul.f32 %v397, 1.442695
        %v399 = vpow.pop %v398
        %v400 = vadd.f32 %v399, 1.0
        %v401 = vrcp.pop %v400
        %v402 = vmul.f32 1.0, %v401
        %v403 = vlaneseq
        %v404 = vshrl.u32 %v403, 7
        %v405 = vsub.s32 0, %v404
        %v406 = vrot.slane %v402, %v405
        %408 = vbcast.lane.b32.xlu0 %v406, 256
        %v409 = vpop.permute.xlu0 %408
        %s411 = sor.u32 256, 8
        %412 = vbcast.lane.b32.xlu0 %v406, %s411
        %v413 = vpop.permute.xlu0 %412
        %s415 = sor.u32 256, 16
        %416 = vbcast.lane.b32.xlu0 %v406, %s415
        %v417 = vpop.permute.xlu0 %416
        %s419 = sor.u32 256, 24
        %420 = vbcast.lane.b32.xlu0 %v406, %s419
        %v421 = vpop.permute.xlu0 %420
        %v422 = vmul.f32 %v189, %v409
        %v423 = vmul.f32 %v190, %v409
        %v424 = vmul.f32 %v191, %v413
        %v425 = vmul.f32 %v192, %v413
        %v426 = vmul.f32 %v193, %v417
        %v427 = vmul.f32 %v194, %v417
        %v428 = vmul.f32 %v195, %v421
        %v429 = vmul.f32 %v196, %v421
        %430 = vst [vmem:[%s188] sm:$0xff] %v422
        %431 = vst [vmem:[%s188 + $0x8] sm:$0xff] %v423
        %432 = vst [vmem:[%s188 + $0x10] sm:$0xff] %v424
        %433 = vst [vmem:[%s188 + $0x18] sm:$0xff] %v425
        %434 = vst [vmem:[%s188 + $0x20] sm:$0xff] %v426
        %435 = vst [vmem:[%s188 + $0x28] sm:$0xff] %v427
        %436 = vst [vmem:[%s188 + $0x30] sm:$0xff] %v428
        %437 = vst [vmem:[%s188 + $0x38] sm:$0xff] %v429
        %s438 = sand.u32 %s96, 1
        %s439 = scalar_lea.sflag [#allocation4], %s438
        %s440 = sand.u32 %s96, 1
        %s441 = smul.addr %s440, 64
        %s442 = scalar_lea.vmem [#allocation5], %s441
        // Predicated region
        $region37: #{tpu_custom_call.1} parent=31 // pred_check
          %p443 = pneg %p106
        $region38: #{tpu_custom_call.1} parent=31 // pred_check_branch
          %445 = sbr.rel (%p443) target = $region40
        $region39: #{tpu_custom_call.1} parent=31 // pred_region
          %s447 = ssub.s32 1024, 1024
          %448 = vsyncadd %s439, %s447
          %s449 = smul.addr %s20, 8
          %s450 = smul.addr %s449, 128
          %s451 = scalar_lea.hbm %s3, %s450
          %s452 = sshll.u32 %s442, 4
          %s453 = int_to_ptr.vmem [resolvable:$true] %s452
          %458 = dma.vmem_to_hbm [thread:$0]  %s453, 1024, %s451, %s439, 256, 256, 16
        $region40: #{tpu_custom_call.1} parent=31 // pred_fallthru
          _
      $region32: #{tpu_custom_call.1} parent=5 // pred_fallthru
        _
      %p459 = scmp.le.s32.totalorder 2, %s15
      // Predicated region
      $region41: #{tpu_custom_call.1} parent=5 // pred_check
        %p460 = pneg %p459
      $region42: #{tpu_custom_call.1} parent=5 // pred_check_branch
        %462 = sbr.rel (%p460) target = $region44
      $region43: #{tpu_custom_call.1} parent=5 // pred_region
        %s463 = ssub.s32 %s15, 2
        // Predicated region
        $region45: #{tpu_custom_call.1} parent=43 // pred_check
          %p464 = pneg %p112
        $region46: #{tpu_custom_call.1} parent=43 // pred_check_branch
          %466 = sbr.rel (%p464) target = $region48
        $region47: #{tpu_custom_call.1} parent=43 // pred_region
          %s467 = sand.u32 %s97, 1
          %s468 = scalar_lea.sflag [#allocation4], %s467
          %s469 = sand.u32 %s97, 1
          %s470 = smul.addr %s469, 64
          %s471 = scalar_lea.vmem [#allocation5], %s470
          %472 = dma.done %s468, 1024
        $region48: #{tpu_custom_call.1} parent=43 // pred_fallthru
          _
      $region44: #{tpu_custom_call.1} parent=5 // pred_fallthru
        _
    $region6: #{tpu_custom_call.1} parent=1 // loop_footer
      %s19 = sadd.s32 1, %s15
    $region7: #{tpu_custom_call.1} parent=1 // loop_footer_branch
      %14 = sbr.rel target = $region3
    $region8: #{tpu_custom_call.1} parent=1 // loop_exit
      _
    %473 = vsyncpa [#allocation3], 1
    %s474 = scalar_lea.sflag [#allocation3], 1
    %475 = vsyncpa %s474, 1
    %476 = vsyncpa [#allocation4], 1
    %s477 = scalar_lea.sflag [#allocation4], 1
    %478 = vsyncpa %s477, 1

</llo_original>
